<compile_context>
chip_gen: v5e
topology: v5e:2x2
jax: 0.10.0
libtpu: 0.0.40
codegen_flags: <defaults>
</compile_context>

<pallas_src>
import math

import jax
import jax.numpy as jnp
from jax import lax
from jax.experimental import pallas as pl
from jax.experimental.pallas import tpu as pltpu

LN_EPS = 1e-5


def _round_up(x, m):
    return ((x + m - 1) // m) * m


def _cdiv(a, b):
    return -(-a // b)


def _vmem_limit_bytes():
    # ~3/4 of physical VMEM, capped at 64 MiB: -> ~48 MiB on v7x (64 MiB
    # physical), 64 MiB on v5e/v6e (128 MiB physical).  Safe fallback 48 MiB.
    try:
        cap = pltpu.get_tpu_info().vmem_capacity_bytes
        return int(min(64 * 1024 * 1024, max(32 * 1024 * 1024, cap * 3 // 4)))
    except Exception:
        return 48 * 1024 * 1024


def _choose_lane_tiling(Mp, Wp, K_pad, C_out, vmem_limit_bytes):
    """Pick (tm, steps) for the flattened (b, h_out, w_pad) lane axis.

    Multi-step tiles are multiples of lcm(Wp, 128): Wp-alignment keeps the
    in-kernel kx shifts from wrapping across rows at interior tile boundaries,
    128 keeps the BlockSpec legal and the stores lane-dense.
    """
    # Per-lane VMEM cost: double-buffered bf16 input block + f32 output block.
    per_lane = 2 * (K_pad * 2 + C_out * 4)
    budget_lanes = max(128, (vmem_limit_bytes // 2) // per_lane)
    if Mp <= budget_lanes:
        # One step: best on single-TC v5e/v6e (per-step overhead ~0.35us); a
        # problem this small gains nothing from sharding across v7x's 2 TCs.
        return _round_up(Mp, 128), 1
    unit = Wp * 128 // math.gcd(Wp, 128)
    tm = max(unit, budget_lanes // unit * unit)
    steps = _cdiv(Mp, tm)
    if steps % 2 == 1:
        # v7x megacore: ("parallel",) shards the grid across 2 TensorCores; an
        # even step count avoids a 2:1 load imbalance (no effect on v5e/v6e).
        tm_alt = max(unit, _round_up(_cdiv(Mp, steps + 1), unit))
        if _cdiv(Mp, tm_alt) % 2 == 0:
            tm = tm_alt
        steps = _cdiv(Mp, tm)
    return tm, steps


def _subsample_fused_kernel(slab_ref, w_ref, prm_ref, o_ref):
    """Fused 3x3 conv (stride (sh,1), pad 1) + bias + LayerNorm, channel-major.

    slab_ref: (K_pad, tm)       bf16; K_pad = pad8(3*C_in); lanes = flat (b, h_out, w_pad)
    w_ref:    (3, C_out, K_pad) bf16; one (C_out, K_pad) weight matrix per kx tap
    prm_ref:  (C_out, 3)        f32;  [conv bias | ln gamma | ln beta]
    o_ref:    (C_out, tm)
    """
    x = slab_ref[...]
    acc = jnp.dot(w_ref[0], x, preferred_element_type=jnp.float32)
    for kx in (1, 2):
        # Output lane m needs slab lane m+kx.  The circular wrap at the tile
        # end only ever lands on per-row padding columns / the zero-padded
        # tail (tile boundaries are row-aligned), which the wrapper discards.
        x_kx = jnp.concatenate([x[:, kx:], x[:, :kx]], axis=1)
        acc = acc + jnp.dot(w_ref[kx], x_kx, preferred_element_type=jnp.float32)
    prm = prm_ref[...]
    acc = acc + prm[:, 0:1]                       # conv bias, broadcast over lanes
    # LayerNorm over channels (sublane axis), f32 throughout.
    mean = jnp.mean(acc, axis=0, keepdims=True)
    diff = acc - mean
    var = jnp.mean(diff * diff, axis=0, keepdims=True)
    xn = diff * lax.rsqrt(var + LN_EPS)
    o_ref[...] = (xn * prm[:, 1:2] + prm[:, 2:3]).astype(o_ref.dtype)


def subsample_forward(x_nchw, conv_w, conv_b, ln_g, ln_b, stride=(2, 1),
                      compute_dtype=jnp.bfloat16, out_dtype=jnp.float32):
    """x_nchw: (B, C_in, H, W).  conv_w: (C_out, C_in, 3, 3) (PyTorch layout).

    Returns (B, H_out*W_out, C_out), matching the PyTorch module.  Pass
    out_dtype=jnp.bfloat16 if the consumer runs bf16 (halves output writeback).
    """
    B, C_in, H, W = x_nchw.shape
    C_out = conv_w.shape[0]
    sh, sw = stride
    if sw != 1:
        # TODO(synk): column stride != 1 would need a strided in-kernel gather; not implemented.
        raise NotImplementedError("subsample_forward: only column stride 1 is supported")
    H_out = (H + 2 - 3) // sh + 1
    W_out = W                      # (W + 2 - 3) // 1 + 1
    Wp = W + 2                     # padded width kept so kx taps shift in-kernel
    Bh = B * H_out
    Mp = Bh * Wp                   # flattened (b, h_out, w_pad) lane extent
    K = 3 * C_in
    K_pad = _round_up(K, 8)        # sublane granularity

    # ---- glue: channel-major, spatially padded, per-ky strided row slices ----
    xc = jnp.transpose(x_nchw, (1, 0, 2, 3))                    # (C_in, B, H, W)
    xp = jnp.pad(xc, ((0, 0), (0, 0), (1, 1), (1, 1)))          # (C_in, B, H+2, W+2)
    views = [xp[:, :, ky:ky + (H_out - 1) * sh + 1:sh, :] for ky in range(3)]
    slab = jnp.stack(views, axis=0)                              # (3, C_in, B, H_out, Wp)
    slab = slab.reshape(K, Mp).astype(compute_dtype)             # sublane=(ky,c), lane=(b,ho,wp)
    if K_pad != K:
        slab = jnp.pad(slab, ((0, K_pad - K), (0, 0)))

    # Per-kx weight matrices with the same (ky, c) ordering as the slab rows.
    w_taps = [jnp.transpose(conv_w[:, :, :, kx], (0, 2, 1)).reshape(C_out, K)
              for kx in range(3)]
    w_stack = jnp.stack(w_taps, axis=0).astype(compute_dtype)    # (3, C_out, K)
    if K_pad != K:
        w_stack = jnp.pad(w_stack, ((0, 0), (0, 0), (0, K_pad - K)))
    params = jnp.stack([conv_b, ln_g, ln_b], axis=1).astype(jnp.float32)  # (C_out, 3)

    vmem_limit = _vmem_limit_bytes()
    tm, steps = _choose_lane_tiling(Mp, Wp, K_pad, C_out, vmem_limit)
    Mp_pad = steps * tm
    if Mp_pad != Mp:
        slab = jnp.pad(slab, ((0, 0), (0, Mp_pad - Mp)))

    out = pl.pallas_call(
        _subsample_fused_kernel,
        out_shape=jax.ShapeDtypeStruct((C_out, Mp_pad), out_dtype),
        grid_spec=pltpu.PrefetchScalarGridSpec(
            num_scalar_prefetch=0,
            grid=(steps,),
            in_specs=[
                # Lane tiles of the slab.  If profiling at real SVTR widths
                # shows exposed DMA, add pipeline_mode=pl.Buffered(3) here only.
                pl.BlockSpec((K_pad, tm), lambda i: (0, i)),
                pl.BlockSpec((3, C_out, K_pad), lambda i: (0, 0, 0)),   # resident
                pl.BlockSpec((C_out, 3), lambda i: (0, 0)),             # resident
            ],
            out_specs=pl.BlockSpec((C_out, tm), lambda i: (0, i)),
        ),
        compiler_params=pltpu.CompilerParams(
            dimension_semantics=("parallel",),
            vmem_limit_bytes=vmem_limit,
        ),
    )(slab, w_stack, params)

    # ---- epilogue (layout only): drop pad columns / fake rows, to (B, H*W, C).
    # If the consumer accepts channel-major (C_out, M), consume `out` directly
    # and skip this transpose.
    out = out[:, :Mp].reshape(C_out, Bh, Wp)[:, :, :W_out]       # (C_out, Bh, W_out)
    out = jnp.transpose(out, (1, 2, 0)).reshape(B, H_out * W_out, C_out)
    return out


def _reference(x_nchw, conv_w, conv_b, ln_g, ln_b, stride=(2, 1)):
    """Pure-JAX f32 reference (conv via lax.conv_general_dilated + LayerNorm)."""
    y = lax.conv_general_dilated(
        x_nchw.astype(jnp.float32), conv_w.astype(jnp.float32),
        window_strides=stride, padding=((1, 1), (1, 1)),
        dimension_numbers=("NCHW", "OIHW", "NCHW"))
    y = y + conv_b.reshape(1, -1, 1, 1)
    B, C, Ho, Wo = y.shape
    y = jnp.transpose(y, (0, 2, 3, 1)).reshape(B, Ho * Wo, C)    # b (h w) c
    mean = jnp.mean(y, axis=-1, keepdims=True)
    var = jnp.mean((y - mean) ** 2, axis=-1, keepdims=True)
    return (y - mean) * lax.rsqrt(var + LN_EPS) * ln_g + ln_b


if __name__ == "__main__":
    key = jax.random.PRNGKey(0)
    k1, k2, k3, k4, k5 = jax.random.split(key, 5)

    # Small shapes consistent with the module: B=2, C_in=4, H=W=16, C_out=8.
    B, C_in, H, W = 2, 4, 16, 16
    C_out = 8
    stride = (2, 1)

    x = jax.random.normal(k1, (B, C_in, H, W), dtype=jnp.float32)
    conv_w = jax.random.normal(k2, (C_out, C_in, 3, 3), dtype=jnp.float32) * 0.1
    conv_b = jax.random.normal(k3, (C_out,), dtype=jnp.float32) * 0.1
    ln_g = 1.0 + 0.1 * jax.random.normal(k4, (C_out,), dtype=jnp.float32)
    ln_b = 0.1 * jax.random.normal(k5, (C_out,), dtype=jnp.float32)

    out = subsample_forward(x, conv_w, conv_b, ln_g, ln_b, stride=stride)
    out = jax.block_until_ready(out)

    # Reference 1: full f32 path (bf16 matmul inputs => small, bounded drift).
    ref_f32 = _reference(x, conv_w, conv_b, ln_g, ln_b, stride=stride)
    assert out.shape == ref_f32.shape == (B, (H // 2) * W, C_out), (out.shape, ref_f32.shape)
    err_f32 = float(jnp.max(jnp.abs(out - ref_f32)))
    assert err_f32 < 2e-2, err_f32

    # Reference 2: same bf16 rounding of conv inputs, f32 accumulation — tight check.
    x_bf = x.astype(jnp.bfloat16).astype(jnp.float32)
    w_bf = conv_w.astype(jnp.bfloat16).astype(jnp.float32)
    ref_bf = _reference(x_bf, w_bf, conv_b, ln_g, ln_b, stride=stride)
    err_bf = float(jnp.max(jnp.abs(out - ref_bf)))
    assert err_bf < 1e-3, err_bf

    print("KERNEL_OK")
</pallas_src>

<mosaic_0001>
module attributes {stable_mosaic.version = 11 : i64} {
  func.func @_subsample_fused_kernel(%arg0: i32, %arg1: memref<16x384xbf16, #tpu.memory_space<vmem>>, %arg2: memref<3x8x16xbf16, #tpu.memory_space<vmem>>, %arg3: memref<8x3xf32, #tpu.memory_space<vmem>>, %arg4: memref<8x384xf32, #tpu.memory_space<vmem>>) attributes {dimension_semantics = [#tpu.dimension_semantics<parallel>], iteration_bounds = array<i64: 1>, scalar_prefetch = 0 : i64, scratch_operands = 0 : i64, tpu.core_type = #tpu.core_type<tc>, window_params = [{transform_indices = @transform_0, window_bounds = array<i64: 16, 384>}, {pipeline_mode = #tpu.pipeline_mode<synchronous>, transform_indices = @transform_1, window_bounds = array<i64: 3, 8, 16>}, {pipeline_mode = #tpu.pipeline_mode<synchronous>, transform_indices = @transform_2, window_bounds = array<i64: 8, 3>}, {transform_indices = @transform_3, window_bounds = array<i64: 8, 384>}]} {
    %c0 = arith.constant 0 : index
    %c0_0 = arith.constant 0 : index
    %0 = vector.load %arg1[%c0, %c0_0] : memref<16x384xbf16, #tpu.memory_space<vmem>>, vector<16x384xbf16>
    %c0_1 = arith.constant 0 : index
    %c0_2 = arith.constant 0 : index
    %c0_3 = arith.constant 0 : index
    %1 = vector.load %arg2[%c0_1, %c0_2, %c0_3] : memref<3x8x16xbf16, #tpu.memory_space<vmem>>, vector<1x8x16xbf16>
    %2 = vector.shape_cast %1 : vector<1x8x16xbf16> to vector<8x16xbf16>
    %cst = arith.constant dense<0.000000e+00> : vector<8x384xf32>
    %3 = tpu.matmul %2, %0, %cst {dimension_numbers = #tpu.dot_dimension_numbers<[1], [0], [0], [1], [0, 0, 1, 1], [], []>} : vector<8x16xbf16>, vector<16x384xbf16>, vector<8x384xf32> -> vector<8x384xf32>
    %4 = vector.extract_strided_slice %0 {offsets = [0, 1], sizes = [16, 383], strides = [1, 1]} : vector<16x384xbf16> to vector<16x383xbf16>
    %5 = vector.extract_strided_slice %0 {offsets = [0, 0], sizes = [16, 1], strides = [1, 1]} : vector<16x384xbf16> to vector<16x1xbf16>
    %6 = tpu.concatenate %4, %5 in 1 : vector<16x383xbf16>, vector<16x1xbf16> -> vector<16x384xbf16>
    %c1 = arith.constant 1 : index
    %c0_4 = arith.constant 0 : index
    %c0_5 = arith.constant 0 : index
    %7 = vector.load %arg2[%c1, %c0_4, %c0_5] : memref<3x8x16xbf16, #tpu.memory_space<vmem>>, vector<1x8x16xbf16>
    %8 = vector.shape_cast %7 : vector<1x8x16xbf16> to vector<8x16xbf16>
    %cst_6 = arith.constant dense<0.000000e+00> : vector<8x384xf32>
    %9 = tpu.matmul %8, %6, %cst_6 {dimension_numbers = #tpu.dot_dimension_numbers<[1], [0], [0], [1], [0, 0, 1, 1], [], []>} : vector<8x16xbf16>, vector<16x384xbf16>, vector<8x384xf32> -> vector<8x384xf32>
    %10 = arith.addf %3, %9 : vector<8x384xf32>
    %11 = vector.extract_strided_slice %0 {offsets = [0, 2], sizes = [16, 382], strides = [1, 1]} : vector<16x384xbf16> to vector<16x382xbf16>
    %12 = vector.extract_strided_slice %0 {offsets = [0, 0], sizes = [16, 2], strides = [1, 1]} : vector<16x384xbf16> to vector<16x2xbf16>
    %13 = tpu.concatenate %11, %12 in 1 : vector<16x382xbf16>, vector<16x2xbf16> -> vector<16x384xbf16>
    %c2 = arith.constant 2 : index
    %c0_7 = arith.constant 0 : index
    %c0_8 = arith.constant 0 : index
    %14 = vector.load %arg2[%c2, %c0_7, %c0_8] : memref<3x8x16xbf16, #tpu.memory_space<vmem>>, vector<1x8x16xbf16>
    %15 = vector.shape_cast %14 : vector<1x8x16xbf16> to vector<8x16xbf16>
    %cst_9 = arith.constant dense<0.000000e+00> : vector<8x384xf32>
    %16 = tpu.matmul %15, %13, %cst_9 {dimension_numbers = #tpu.dot_dimension_numbers<[1], [0], [0], [1], [0, 0, 1, 1], [], []>} : vector<8x16xbf16>, vector<16x384xbf16>, vector<8x384xf32> -> vector<8x384xf32>
    %17 = arith.addf %10, %16 : vector<8x384xf32>
    %c0_10 = arith.constant 0 : index
    %c0_11 = arith.constant 0 : index
    %18 = vector.load %arg3[%c0_10, %c0_11] : memref<8x3xf32, #tpu.memory_space<vmem>>, vector<8x3xf32>
    %19 = vector.extract_strided_slice %18 {offsets = [0, 0], sizes = [8, 1], strides = [1, 1]} : vector<8x3xf32> to vector<8x1xf32>
    %20 = vector.broadcast %19 : vector<8x1xf32> to vector<8x384xf32>
    %21 = arith.addf %17, %20 : vector<8x384xf32>
    %cst_12 = arith.constant dense<0.000000e+00> : vector<384xf32>
    %22 = vector.multi_reduction <add>, %21, %cst_12 [0] : vector<8x384xf32> to vector<384xf32>
    %23 = vector.shape_cast %22 : vector<384xf32> to vector<1x384xf32>
    %cst_13 = arith.constant 8.000000e+00 : f32
    %24 = vector.broadcast %cst_13 : f32 to vector<1x384xf32>
    %25 = arith.divf %23, %24 : vector<1x384xf32>
    %26 = vector.broadcast %25 : vector<1x384xf32> to vector<8x384xf32>
    %27 = arith.subf %21, %26 : vector<8x384xf32>
    %28 = arith.mulf %27, %27 : vector<8x384xf32>
    %cst_14 = arith.constant dense<0.000000e+00> : vector<384xf32>
    %29 = vector.multi_reduction <add>, %28, %cst_14 [0] : vector<8x384xf32> to vector<384xf32>
    %30 = vector.shape_cast %29 : vector<384xf32> to vector<1x384xf32>
    %cst_15 = arith.constant 8.000000e+00 : f32
    %31 = vector.broadcast %cst_15 : f32 to vector<1x384xf32>
    %32 = arith.divf %30, %31 : vector<1x384xf32>
    %cst_16 = arith.constant 9.99999974E-6 : f32
    %33 = vector.broadcast %cst_16 : f32 to vector<1x384xf32>
    %34 = arith.addf %32, %33 : vector<1x384xf32>
    %35 = math.rsqrt %34 : vector<1x384xf32>
    %36 = vector.broadcast %35 : vector<1x384xf32> to vector<8x384xf32>
    %37 = arith.mulf %27, %36 : vector<8x384xf32>
    %38 = vector.extract_strided_slice %18 {offsets = [0, 1], sizes = [8, 1], strides = [1, 1]} : vector<8x3xf32> to vector<8x1xf32>
    %39 = vector.broadcast %38 : vector<8x1xf32> to vector<8x384xf32>
    %40 = arith.mulf %37, %39 : vector<8x384xf32>
    %41 = vector.extract_strided_slice %18 {offsets = [0, 2], sizes = [8, 1], strides = [1, 1]} : vector<8x3xf32> to vector<8x1xf32>
    %42 = vector.broadcast %41 : vector<8x1xf32> to vector<8x384xf32>
    %43 = arith.addf %40, %42 : vector<8x384xf32>
    %c0_17 = arith.constant 0 : index
    %c0_18 = arith.constant 0 : index
    %44 = vector.load %arg4[%c0_17, %c0_18] : memref<8x384xf32, #tpu.memory_space<vmem>>, vector<8x384xf32>
    tpu.vector_store %arg4[%c0_17, %c0_18], %43 {strides = array<i32>} : memref<8x384xf32, #tpu.memory_space<vmem>>, vector<8x384xf32>,
    return
  }
  func.func @transform_0(%arg0: i32) -> (i32, i32) {
    %c0_i32 = arith.constant 0 : i32
    %c0_i32_0 = arith.constant 0 : i32
    return %c0_i32, %arg0 : i32, i32
  }
  func.func @transform_1(%arg0: i32) -> (i32, i32, i32) {
    %c0_i32 = arith.constant 0 : i32
    %c0_i32_0 = arith.constant 0 : i32
    %c0_i32_1 = arith.constant 0 : i32
    %c0_i32_2 = arith.constant 0 : i32
    return %c0_i32, %c0_i32_0, %c0_i32_1 : i32, i32, i32
  }
  func.func @transform_2(%arg0: i32) -> (i32, i32) {
    %c0_i32 = arith.constant 0 : i32
    %c0_i32_0 = arith.constant 0 : i32
    %c0_i32_1 = arith.constant 0 : i32
    return %c0_i32, %c0_i32_0 : i32, i32
  }
  func.func @transform_3(%arg0: i32) -> (i32, i32) {
    %c0_i32 = arith.constant 0 : i32
    %c0_i32_0 = arith.constant 0 : i32
    return %c0_i32, %arg0 : i32, i32
  }
}

</mosaic_0001>

<llo_original>
// kernel: tpu_custom_call.1
$region0: #{tpu_custom_call.1}
  #allocation0 [shape = 'u32[]', space=smem, size = 0x4, offset = 0x4, fixed_abs, tag = 'smem constant byte address 0x4 - core index']
  #allocation1 [shape = 'u32[72,128]{1,0:T(1,128)}', space=vmem, size = 0x9000, scoped, tag = 'internal scratch']
  %s0 = inlined_call_operand.hbm [shape: bf16[16,384], index: 0, kind: input, shape index: {}]
  %s1 = inlined_call_operand.vmem [shape: bf16[3,8,16], index: 1, kind: input, shape index: {}]
  %s2 = inlined_call_operand.vmem [shape: f32[8,3], index: 2, kind: input, shape index: {}]
  %s3 = inlined_call_operand.hbm [shape: f32[8,384], index: 3, kind: output, shape index: {}]
  %s4 = sld [smem:[#allocation0]]
  $region26: #{tpu_custom_call.1} parent=0
    _
  %s6 = ssub.s32 1, %s4
  %s7 = scalar_select 0, %s6, %s4
  $region1: #{tpu_custom_call.1} parent=0
    #allocation2 [shape = 'u8[12288]{0}', space=vmem, size = 0x3000, scoped, tag = 'input window, operand 0, single buffered']
    #allocation3 [shape = 's32[1]{0}', space=sflag, size = 0x4, scoped, tag = 'scoped memory for tpu_custom_call.1']
    #allocation4 [shape = 's32[1]{0}', space=sflag, size = 0x4, scoped, tag = 'scoped memory for tpu_custom_call.1']
    #allocation5 [shape = 'u8[12288]{0}', space=vmem, size = 0x3000, scoped, tag = 'output window, operand 0, single buffered']
    %8 = vsyncpa [#allocation3], 0
    %9 = vsyncpa [#allocation4], 0
    // Predicated region
    $region2: #{tpu_custom_call.1} parent=1 // pred_check
      _
    $region3: #{tpu_custom_call.1} parent=1 // pred_check_branch
      %11 = sbr.rel (0) target = $region5
    $region4: #{tpu_custom_call.1} parent=1 // pred_region
      %13 = vsyncadd [#allocation3], 0
      %s14 = sshll.u32 %s0, 4
      %s15 = int_to_ptr.hbm [resolvable:$true] %s14
      %s16 = sshll.u32 [#allocation2], 4
      %s17 = int_to_ptr.vmem [resolvable:$true] %s16
      %22 = dma.hbm_to_vmem [thread:$0]  %s15, 384, %s17, [#allocation3], 192, 192, 12
    $region5: #{tpu_custom_call.1} parent=1 // pred_fallthru
      _
    // Predicated region
    $region6: #{tpu_custom_call.1} parent=1 // pred_check
      _
    $region7: #{tpu_custom_call.1} parent=1 // pred_check_branch
      %24 = sbr.rel (0) target = $region9
    $region8: #{tpu_custom_call.1} parent=1 // pred_region
      _
    $region9: #{tpu_custom_call.1} parent=1 // pred_fallthru
      _
    // Predicated region
    $region10: #{tpu_custom_call.1} parent=1 // pred_check
      _
    $region11: #{tpu_custom_call.1} parent=1 // pred_check_branch
      %26 = sbr.rel (0) target = $region13
    $region12: #{tpu_custom_call.1} parent=1 // pred_region
      _
    $region13: #{tpu_custom_call.1} parent=1 // pred_fallthru
      _
    // Predicated region
    $region14: #{tpu_custom_call.1} parent=1 // pred_check
      _
    $region15: #{tpu_custom_call.1} parent=1 // pred_check_branch
      %28 = sbr.rel (0) target = $region17
    $region16: #{tpu_custom_call.1} parent=1 // pred_region
      %30 = dma.done [#allocation3], 384
    $region17: #{tpu_custom_call.1} parent=1 // pred_fallthru
      _
    %v32 = vld [vmem:[#allocation2] sm:$0xff]
    %v33 = vld [vmem:[#allocation2 + $0x8] sm:$0xf]
    %v34 = vld [vmem:[#allocation2 + $0xc] sm:$0xff]
    %v35 = vld [vmem:[#allocation2 + $0x14] sm:$0xf]
    %v36 = vld [vmem:[%s1] sm:$0xf]
    %v41 = vunpack.c.l.b16 %v32
    %v42 = vunpack.c.h.b16 %v32
    %v43 = vunpack.c.l.b16 %v33
    %v44 = vunpack.c.l.b16 %v34
    %v45 = vunpack.c.h.b16 %v34
    %v46 = vunpack.c.l.b16 %v35
    %v47 = vpack.c.b16 %v44, %v41
    %v48 = vpack.c.b16 %v45, %v42
    %v49 = vpack.c.b16 %v46, %v43
    %50 = vrot.lane.b32.xlu0 %v47, 127
    %v51 = vpop.permute.xlu0 %50
    %52 = vrot.lane.b32.xlu0 %v48, 127
    %v53 = vpop.permute.xlu0 %52
    %54 = vrot.lane.b32.xlu0 %v49, 127
    %v55 = vpop.permute.xlu0 %54
    %vm56 = vcmask 1039360
    %v57 = vsel %vm56, %v51, %v53
    %v58 = vsel %vm56, %v53, %v55
    %vm61 = vcmask 1039360
    %v64 = vsel %vm61, %v55, %v51
    %s66 = scalar_lea.vmem %s1, 4
    %v67 = vld [vmem:[%s66] sm:$0xf]
    %vm68 = vcmask 130048
    %v70 = vsel %vm68, %v67, 0
    %72 = vmatpush.bf16.msra.mxu0 0
    %73 = vmatpush.bf16.msra.mxu0 0
    %74 = vmatpush.bf16.msra.mxu0 0
    %75 = vmatpush.bf16.msra.mxu0 0
    %76 = vmatpush.bf16.msra.mxu0 0
    %77 = vmatpush.bf16.msra.mxu0 0
    %78 = vmatpush.bf16.msra.mxu0 0
    %79 = vmatpush.bf16.msra.mxu0 %v57
    %80 = vmatmul.bf16.gmra.mxu0 %v70
    %v81 = vpop.f32.mrf.mxu0
    %v82 = vadd.f32 0.0, %v81
    %v83 = vpop.f32.mrf.mxu0
    %84 = vdwg.mxu0
    %85 = vmatpush.bf16.msra.mxu0 0
    %86 = vmatpush.bf16.msra.mxu0 0
    %87 = vmatpush.bf16.msra.mxu0 0
    %88 = vmatpush.bf16.msra.mxu0 0
    %89 = vmatpush.bf16.msra.mxu0 0
    %90 = vmatpush.bf16.msra.mxu0 0
    %91 = vmatpush.bf16.msra.mxu0 0
    %92 = vmatpush.bf16.msra.mxu0 %v58
    %93 = vmatmul.bf16.gmra.mxu0 %v70
    %v94 = vpop.f32.mrf.mxu0
    %v95 = vadd.f32 0.0, %v94
    %v96 = vpop.f32.mrf.mxu0
    %97 = vdwg.mxu0
    %98 = vmatpush.bf16.msra.mxu0 0
    %99 = vmatpush.bf16.msra.mxu0 0
    %100 = vmatpush.bf16.msra.mxu0 0
    %101 = vmatpush.bf16.msra.mxu0 0
    %102 = vmatpush.bf16.msra.mxu0 0
    %103 = vmatpush.bf16.msra.mxu0 0
    %104 = vmatpush.bf16.msra.mxu0 0
    %105 = vmatpush.bf16.msra.mxu0 %v64
    %106 = vmatmul.bf16.gmra.mxu0 %v70
    %v107 = vpop.f32.mrf.mxu0
    %v108 = vadd.f32 0.0, %v107
    %v109 = vpop.f32.mrf.mxu0
    %110 = vdwg.mxu0
    %v115 = vsel %vm68, %v36, 0
    %117 = vmatpush.bf16.msra.mxu0 0
    %118 = vmatpush.bf16.msra.mxu0 0
    %119 = vmatpush.bf16.msra.mxu0 0
    %120 = vmatpush.bf16.msra.mxu0 0
    %121 = vmatpush.bf16.msra.mxu0 0
    %122 = vmatpush.bf16.msra.mxu0 0
    %123 = vmatpush.bf16.msra.mxu0 0
    %124 = vmatpush.bf16.msra.mxu0 %v47
    %125 = vmatmul.bf16.gmra.mxu0 %v115
    %v126 = vpop.f32.mrf.mxu0
    %v127 = vadd.f32 %v82, %v126
    %v128 = vpop.f32.mrf.mxu0
    %129 = vdwg.mxu0
    %130 = vmatpush.bf16.msra.mxu0 0
    %131 = vmatpush.bf16.msra.mxu0 0
    %132 = vmatpush.bf16.msra.mxu0 0
    %133 = vmatpush.bf16.msra.mxu0 0
    %134 = vmatpush.bf16.msra.mxu0 0
    %135 = vmatpush.bf16.msra.mxu0 0
    %136 = vmatpush.bf16.msra.mxu0 0
    %137 = vmatpush.bf16.msra.mxu0 %v48
    %138 = vmatmul.bf16.gmra.mxu0 %v115
    %v139 = vpop.f32.mrf.mxu0
    %v140 = vadd.f32 %v95, %v139
    %v141 = vpop.f32.mrf.mxu0
    %142 = vdwg.mxu0
    %143 = vmatpush.bf16.msra.mxu0 0
    %144 = vmatpush.bf16.msra.mxu0 0
    %145 = vmatpush.bf16.msra.mxu0 0
    %146 = vmatpush.bf16.msra.mxu0 0
    %147 = vmatpush.bf16.msra.mxu0 0
    %148 = vmatpush.bf16.msra.mxu0 0
    %149 = vmatpush.bf16.msra.mxu0 0
    %150 = vmatpush.bf16.msra.mxu0 %v49
    %151 = vmatmul.bf16.gmra.mxu0 %v115
    %v152 = vpop.f32.mrf.mxu0
    %v153 = vadd.f32 %v108, %v152
    %v154 = vpop.f32.mrf.mxu0
    %155 = vdwg.mxu0
    %156 = vrot.lane.b32.xlu0 %v47, 126
    %v157 = vpop.permute.xlu0 %156
    %158 = vrot.lane.b32.xlu0 %v48, 126
    %v159 = vpop.permute.xlu0 %158
    %160 = vrot.lane.b32.xlu0 %v49, 126
    %v161 = vpop.permute.xlu0 %160
    %vm162 = vcmask 1031168
    %v163 = vsel %vm162, %v157, %v159
    %v164 = vsel %vm162, %v159, %v161
    %vm167 = vcmask 1031168
    %v170 = vsel %vm167, %v161, %v157
    %s172 = scalar_lea.vmem %s1, 8
    %v173 = vld [vmem:[%s172] sm:$0xf]
    %v175 = vsel %vm68, %v173, 0
    %177 = vmatpush.bf16.msra.mxu0 0
    %178 = vmatpush.bf16.msra.mxu0 0
    %179 = vmatpush.bf16.msra.mxu0 0
    %180 = vmatpush.bf16.msra.mxu0 0
    %181 = vmatpush.bf16.msra.mxu0 0
    %182 = vmatpush.bf16.msra.mxu0 0
    %183 = vmatpush.bf16.msra.mxu0 0
    %184 = vmatpush.bf16.msra.mxu0 %v163
    %185 = vmatmul.bf16.gmra.mxu0 %v175
    %v186 = vpop.f32.mrf.mxu0
    %v187 = vadd.f32 0.0, %v186
    %v188 = vpop.f32.mrf.mxu0
    %189 = vdwg.mxu0
    %190 = vmatpush.bf16.msra.mxu0 0
    %191 = vmatpush.bf16.msra.mxu0 0
    %192 = vmatpush.bf16.msra.mxu0 0
    %193 = vmatpush.bf16.msra.mxu0 0
    %194 = vmatpush.bf16.msra.mxu0 0
    %195 = vmatpush.bf16.msra.mxu0 0
    %196 = vmatpush.bf16.msra.mxu0 0
    %197 = vmatpush.bf16.msra.mxu0 %v164
    %198 = vmatmul.bf16.gmra.mxu0 %v175
    %v199 = vpop.f32.mrf.mxu0
    %v200 = vadd.f32 0.0, %v199
    %v201 = vpop.f32.mrf.mxu0
    %202 = vdwg.mxu0
    %203 = vmatpush.bf16.msra.mxu0 0
    %204 = vmatpush.bf16.msra.mxu0 0
    %205 = vmatpush.bf16.msra.mxu0 0
    %206 = vmatpush.bf16.msra.mxu0 0
    %207 = vmatpush.bf16.msra.mxu0 0
    %208 = vmatpush.bf16.msra.mxu0 0
    %209 = vmatpush.bf16.msra.mxu0 0
    %210 = vmatpush.bf16.msra.mxu0 %v170
    %211 = vmatmul.bf16.gmra.mxu0 %v175
    %v212 = vpop.f32.mrf.mxu0
    %v213 = vadd.f32 0.0, %v212
    %v214 = vpop.f32.mrf.mxu0
    %215 = vdwg.mxu0
    %v216 = vadd.f32 %v127, %v187
    %v217 = vadd.f32 %v140, %v200
    %v218 = vadd.f32 %v153, %v213
    %v219 = vld [vmem:[%s2] sm:$0xff]
    %221 = vset.pattern.permute.xlu0 0
    %222 = vperm.xlu0 %221, %v219
    %v223 = vpop.permute.xlu0 %222
    %v225 = vadd.f32 %v216, %v223
    %v226 = vadd.f32 %v217, %v223
    %v227 = vadd.f32 %v218, %v223
    %v228 = vrot.slane %v225, 4
    %v229 = vadd.f32 %v225, %v228
    %v230 = vrot.slane %v229, 2
    %v231 = vadd.f32 %v229, %v230
    %v232 = vrot.slane %v231, 1
    %v233 = vadd.f32 %v231, %v232
    %v234 = vrot.slane %v226, 4
    %v235 = vadd.f32 %v226, %v234
    %v236 = vrot.slane %v235, 2
    %v237 = vadd.f32 %v235, %v236
    %v238 = vrot.slane %v237, 1
    %v239 = vadd.f32 %v237, %v238
    %v240 = vrot.slane %v227, 4
    %v241 = vadd.f32 %v227, %v240
    %v242 = vrot.slane %v241, 2
    %v243 = vadd.f32 %v241, %v242
    %v244 = vrot.slane %v243, 1
    %v245 = vadd.f32 %v243, %v244
    %v246 = vrcp.pop 8.0
    %v247 = vmul.f32 8.0, %v246
    %v248 = vsub.f32 1.0, %v247
    %v249 = vmul.f32 %v246, %v248
    %v250 = vadd.f32 %v246, %v249
    %vm251 = vweird.f32 %v246
    %v252 = vsel %vm251, %v246, %v250
    %v253 = vmul.f32 %v233, %v252
    %v254 = vmul.f32 %v239, %v252
    %v255 = vmul.f32 %v245, %v252
    %v256 = vsub.f32 %v225, %v253
    %v257 = vsub.f32 %v226, %v254
    %v258 = vsub.f32 %v227, %v255
    %v259 = vmul.f32 %v256, %v256
    %v260 = vmul.f32 %v257, %v257
    %v261 = vmul.f32 %v258, %v258
    %v262 = vrot.slane %v259, 4
    %v263 = vadd.f32 %v259, %v262
    %v264 = vrot.slane %v263, 2
    %v265 = vadd.f32 %v263, %v264
    %v266 = vrot.slane %v265, 1
    %v267 = vadd.f32 %v265, %v266
    %v268 = vrot.slane %v260, 4
    %v269 = vadd.f32 %v260, %v268
    %v270 = vrot.slane %v269, 2
    %v271 = vadd.f32 %v269, %v270
    %v272 = vrot.slane %v271, 1
    %v273 = vadd.f32 %v271, %v272
    %v274 = vrot.slane %v261, 4
    %v275 = vadd.f32 %v261, %v274
    %v276 = vrot.slane %v275, 2
    %v277 = vadd.f32 %v275, %v276
    %v278 = vrot.slane %v277, 1
    %v279 = vadd.f32 %v277, %v278
    %v280 = vmul.f32 %v267, %v252
    %v281 = vmul.f32 %v273, %v252
    %v282 = vmul.f32 %v279, %v252
    %v283 = vadd.f32 %v280, 1e-05
    %v284 = vadd.f32 %v281, 1e-05
    %v285 = vadd.f32 %v282, 1e-05
    %v286 = vrsqrt.pop %v283
    %v287 = vmul.f32 %v286, %v283
    %v288 = vmul.f32 %v287, %v286
    %v289 = vmul.f32 0.5, %v288
    %v290 = vsub.f32 1.5, %v289
    %v291 = vmul.f32 %v286, %v290
    %vm292 = vweird.f32 %v283
    %vm293 = vweird.f32 %v286
    %vm294 = vmor %vm292, %vm293
    %v295 = vsel %vm294, %v286, %v291
    %v296 = vrsqrt.pop %v284
    %v297 = vmul.f32 %v296, %v284
    %v298 = vmul.f32 %v297, %v296
    %v299 = vmul.f32 0.5, %v298
    %v300 = vsub.f32 1.5, %v299
    %v301 = vmul.f32 %v296, %v300
    %vm302 = vweird.f32 %v284
    %vm303 = vweird.f32 %v296
    %vm304 = vmor %vm302, %vm303
    %v305 = vsel %vm304, %v296, %v301
    %v306 = vrsqrt.pop %v285
    %v307 = vmul.f32 %v306, %v285
    %v308 = vmul.f32 %v307, %v306
    %v309 = vmul.f32 0.5, %v308
    %v310 = vsub.f32 1.5, %v309
    %v311 = vmul.f32 %v306, %v310
    %vm312 = vweird.f32 %v285
    %vm313 = vweird.f32 %v306
    %vm314 = vmor %vm312, %vm313
    %v315 = vsel %vm314, %v306, %v311
    %v316 = vmul.f32 %v256, %v295
    %v317 = vmul.f32 %v257, %v305
    %v318 = vmul.f32 %v258, %v315
    %319 = vset.pattern.permute.xlu0 1
    %320 = vperm.xlu0 %319, %v219
    %v321 = vpop.permute.xlu0 %320
    %v323 = vmul.f32 %v316, %v321
    %v324 = vmul.f32 %v317, %v321
    %v325 = vmul.f32 %v318, %v321
    %326 = vset.pattern.permute.xlu0 2
    %327 = vperm.xlu0 %326, %v219
    %v328 = vpop.permute.xlu0 %327
    %v330 = vadd.f32 %v323, %v328
    %v331 = vadd.f32 %v324, %v328
    %v332 = vadd.f32 %v325, %v328
    %333 = vst [vmem:[#allocation5] sm:$0xff] %v330
    %334 = vst [vmem:[#allocation5 + $0x8] sm:$0xff] %v331
    %335 = vst [vmem:[#allocation5 + $0x10] sm:$0xff] %v332
    // Predicated region
    $region18: #{tpu_custom_call.1} parent=1 // pred_check
      _
    $region19: #{tpu_custom_call.1} parent=1 // pred_check_branch
      %337 = sbr.rel (0) target = $region21
    $region20: #{tpu_custom_call.1} parent=1 // pred_region
      %339 = vsyncadd [#allocation4], 0
      %s341 = sshll.u32 [#allocation5], 4
      %s342 = int_to_ptr.vmem [resolvable:$true] %s341
      %s343 = sshll.u32 %s3, 4
      %s344 = int_to_ptr.hbm [resolvable:$true] %s343
      %346 = dma.vmem_to_hbm [thread:$0]  %s342, 384, %s344, [#allocation4]
    $region21: #{tpu_custom_call.1} parent=1 // pred_fallthru
      _
    // Predicated region
    $region22: #{tpu_custom_call.1} parent=1 // pred_check
      _
    $region23: #{tpu_custom_call.1} parent=1 // pred_check_branch
      %348 = sbr.rel (0) target = $region25
    $region24: #{tpu_custom_call.1} parent=1 // pred_region
      %350 = dma.done [#allocation4], 384
    $region25: #{tpu_custom_call.1} parent=1 // pred_fallthru
      _
    %351 = vsyncpa [#allocation3], 1
    %352 = vsyncpa [#allocation4], 1

</llo_original>
